<compile_context>
chip_gen: v6e
topology: v6e:2x2x1
jax: 0.10.0
libtpu: 0.0.40
codegen_flags: <defaults>
</compile_context>

<pallas_src>
import functools

import jax
import jax.numpy as jnp
from jax.experimental import pallas as pl
from jax.experimental.pallas import tpu as pltpu

LOG_STD_MIN = -20.0
LOG_STD_MAX = 2.0

_LANE = 128
_SUBLANE = 8
_MAX_BATCH_TILE = 1024                 # plenty of VMEM headroom for IO tiles
_SINGLE_BUFFER_THRESHOLD = 8 << 20     # single-buffer weights above 8 MiB


def _round_up(x, m):
    return ((x + m - 1) // m) * m


def _mxu_pad_multiple():
    """256 for 256-wide MXUs (v6e / v7x), 128 for earlier chips."""
    try:
        kind = jax.devices()[0].device_kind.lower()
    except Exception:
        return 128
    if any(v in kind for v in ("v2", "v3", "v4", "v5")):
        return 128
    return 256


def _policy_kernel(state_ref, w1_ref, w234_ref, b_ref, wh_ref, bh_ref, out_ref,
                   *, num_actions):
    """One batch tile: 4 hidden layers + fused mean/log_std head.

    Weights are bf16, activations are downcast to bf16 right before each MXU
    matmul, accumulation and all elementwise math stay in f32.
    """
    hid = w234_ref.shape[0]            # padded hidden width (static)

    x = state_ref[...].astype(jnp.bfloat16)

    h = jnp.dot(x, w1_ref[...], preferred_element_type=jnp.float32) + b_ref[0:1, :]
    h = jnp.maximum(h, 0.0)

    # Layers 2..4 read lane-slices of the packed [hid, 3*hid] weight slab.
    for k in range(3):
        w_k = w234_ref[:, k * hid:(k + 1) * hid]
        h = (jnp.dot(h.astype(jnp.bfloat16), w_k,
                     preferred_element_type=jnp.float32)
             + b_ref[k + 1:k + 2, :])
        h = jnp.maximum(h, 0.0)

    # Fused head: lanes [0, A) = mean, lanes [A, 2A) = log_std, rest zero-pad.
    head = (jnp.dot(h.astype(jnp.bfloat16), wh_ref[...],
                    preferred_element_type=jnp.float32)
            + bh_ref[...])

    # Clamp only the log_std (and pad) lanes; mean lanes pass through untouched.
    col = jax.lax.broadcasted_iota(jnp.int32, head.shape, dimension=1)
    clipped = jnp.clip(head, LOG_STD_MIN, LOG_STD_MAX)
    head = jnp.where(col < num_actions, head, clipped)

    out_ref[...] = head.astype(out_ref.dtype)


def prepare_params(params):
    """One-time layout work: pad, fuse heads, pack slabs, cast weights to bf16.

    Padded rows/cols are exact zeros, so the math is unchanged.  Biases stay in
    f32 (added onto the f32 MXU accumulator inside the kernel).
    """
    num_inputs, hidden = params["w1"].shape
    num_actions = params["wm"].shape[1]

    mult = _mxu_pad_multiple()
    hid_pad = _round_up(hidden, mult)
    out_pad = _round_up(max(2 * num_actions, _LANE), _LANE)

    def padw(a, rows, cols):
        a = a.astype(jnp.float32)
        a = jnp.pad(a, ((0, rows - a.shape[0]), (0, cols - a.shape[1])))
        return a.astype(jnp.bfloat16)

    def padb(a, cols):
        a = a.astype(jnp.float32).reshape(1, -1)
        return jnp.pad(a, ((0, 0), (0, cols - a.shape[1])))

    # First layer keeps its native K (feature) width: no lane pad of the state.
    w1 = padw(params["w1"], num_inputs, hid_pad)                   # [feat, H]
    w234 = jnp.concatenate([padw(params["w2"], hid_pad, hid_pad),
                            padw(params["w3"], hid_pad, hid_pad),
                            padw(params["w4"], hid_pad, hid_pad)], axis=1)  # [H, 3H]
    b1234 = jnp.concatenate([padb(params["b1"], hid_pad),
                             padb(params["b2"], hid_pad),
                             padb(params["b3"], hid_pad),
                             padb(params["b4"], hid_pad)], axis=0)          # [4, H]
    wh = padw(jnp.concatenate([params["wm"], params["ws"]], axis=1),
              hid_pad, out_pad)                                             # [H, out]
    bh = padb(jnp.concatenate([params["bm"], params["bs"]], axis=1), out_pad)

    return dict(w1=w1, w234=w234, b1234=b1234, wh=wh, bh=bh)


_PARAM_ORDER = ("w1", "w234", "b1234", "wh", "bh")


@functools.partial(jax.jit, static_argnames=("num_actions",))
def policy_forward(state, prepared, *, num_actions):
    """Runs the PolicyNetwork forward pass. Returns (mean, log_std)."""
    batch, feat = state.shape
    hid_pad = prepared["w234"].shape[0]
    out_pad = prepared["wh"].shape[1]

    # Batch tiling: at least 2 tiles whenever batch allows it (v7x has 2 TCs),
    # capped at 1024 rows per tile (v5e/v6e: fewer grid steps, weights resident).
    if batch <= _SUBLANE:
        tile_b = _SUBLANE
    else:
        tile_b = min(_MAX_BATCH_TILE, _round_up(-(-batch // 2), _SUBLANE))
    padded_b = _round_up(batch, tile_b)

    # Only a cheap batch-row pad; feature dim stays native (full-dim BlockSpec).
    if padded_b != batch:
        state_p = jnp.pad(state.astype(jnp.float32),
                          ((0, padded_b - batch), (0, 0)))
    else:
        state_p = state.astype(jnp.float32)

    grid = (padded_b // tile_b,)

    def batch_map(i):
        return (i, 0)

    def resident_map(i):
        return (0, 0)

    param_bytes = sum(int(prepared[n].size) * prepared[n].dtype.itemsize
                      for n in _PARAM_ORDER)
    single_buffer = param_bytes > _SINGLE_BUFFER_THRESHOLD

    in_specs = [pl.BlockSpec((tile_b, feat), batch_map)]
    for name in _PARAM_ORDER:
        shape = prepared[name].shape
        if single_buffer:
            # Weights never change across grid steps: no need to double-buffer.
            in_specs.append(pl.BlockSpec(shape, resident_map,
                                         pipeline_mode=pl.Buffered(1)))
        else:
            in_specs.append(pl.BlockSpec(shape, resident_map))

    # VMEM budget: params (x2 if double-buffered) + IO tiles + activations.
    weight_factor = 1 if single_buffer else 2
    io_bytes = 2 * tile_b * feat * 4 + 2 * tile_b * out_pad * 4
    act_bytes = 6 * tile_b * hid_pad * 4
    vmem_needed = weight_factor * param_bytes + io_bytes + act_bytes
    vmem_limit = int(min(110 << 20, max(32 << 20, int(vmem_needed * 1.5))))

    flops = 2 * padded_b * (feat * hid_pad
                            + 3 * hid_pad * hid_pad
                            + hid_pad * out_pad)
    bytes_accessed = (4 * padded_b * feat + 4 * padded_b * out_pad + param_bytes)

    out = pl.pallas_call(
        functools.partial(_policy_kernel, num_actions=num_actions),
        out_shape=jax.ShapeDtypeStruct((padded_b, out_pad), jnp.float32),
        grid_spec=pltpu.PrefetchScalarGridSpec(
            num_scalar_prefetch=0,
            grid=grid,
            in_specs=in_specs,
            out_specs=pl.BlockSpec((tile_b, out_pad), batch_map),
        ),
        compiler_params=pltpu.CompilerParams(
            dimension_semantics=("parallel",),
            vmem_limit_bytes=vmem_limit),
        cost_estimate=pl.CostEstimate(
            flops=flops, transcendentals=0, bytes_accessed=bytes_accessed),
    )(state_p, *(prepared[n] for n in _PARAM_ORDER))

    mean = out[:batch, :num_actions]
    log_std = out[:batch, num_actions:2 * num_actions]
    return mean, log_std


def init_params(key, num_inputs, num_actions, hidden_size, init_w=0.003):
    """Deterministic parameter init mirroring the PyTorch module's __init__.

    nn.Linear default init: U(-1/sqrt(fan_in), 1/sqrt(fan_in)) for W and b.
    mean_linear / log_std_linear: U(-init_w, init_w) for W and b.
    Weights are stored as [in_features, out_features] (transposed vs. torch).
    """
    keys = jax.random.split(key, 12)

    def linear(kw, kb, fan_in, fan_out, bound):
        w = jax.random.uniform(kw, (fan_in, fan_out), jnp.float32, -bound, bound)
        b = jax.random.uniform(kb, (1, fan_out), jnp.float32, -bound, bound)
        return w, b

    b1w = 1.0 / (num_inputs ** 0.5)
    bhw = 1.0 / (hidden_size ** 0.5)

    w1, b1 = linear(keys[0], keys[1], num_inputs, hidden_size, b1w)
    w2, b2 = linear(keys[2], keys[3], hidden_size, hidden_size, bhw)
    w3, b3 = linear(keys[4], keys[5], hidden_size, hidden_size, bhw)
    w4, b4 = linear(keys[6], keys[7], hidden_size, hidden_size, bhw)
    wm, bm = linear(keys[8], keys[9], hidden_size, num_actions, init_w)
    ws, bs = linear(keys[10], keys[11], hidden_size, num_actions, init_w)

    return dict(w1=w1, b1=b1, w2=w2, b2=b2, w3=w3, b3=b3, w4=w4, b4=b4,
                wm=wm, bm=bm, ws=ws, bs=bs)


def reference_forward(state, params):
    """Plain-JAX f32 reference (unpadded params)."""
    h = jnp.maximum(state @ params["w1"] + params["b1"], 0.0)
    h = jnp.maximum(h @ params["w2"] + params["b2"], 0.0)
    h = jnp.maximum(h @ params["w3"] + params["b3"], 0.0)
    h = jnp.maximum(h @ params["w4"] + params["b4"], 0.0)
    mean = h @ params["wm"] + params["bm"]
    log_std = jnp.clip(h @ params["ws"] + params["bs"], LOG_STD_MIN, LOG_STD_MAX)
    return mean, log_std


def reference_forward_bf16(state, params):
    """Plain-JAX reference with the same bf16-matmul / f32-accumulate recipe."""
    def mm(a, w):
        return jnp.dot(a.astype(jnp.bfloat16), w.astype(jnp.bfloat16),
                       preferred_element_type=jnp.float32)
    h = jnp.maximum(mm(state, params["w1"]) + params["b1"], 0.0)
    h = jnp.maximum(mm(h, params["w2"]) + params["b2"], 0.0)
    h = jnp.maximum(mm(h, params["w3"]) + params["b3"], 0.0)
    h = jnp.maximum(mm(h, params["w4"]) + params["b4"], 0.0)
    mean = mm(h, params["wm"]) + params["bm"]
    log_std = jnp.clip(mm(h, params["ws"]) + params["bs"],
                       LOG_STD_MIN, LOG_STD_MAX)
    return mean, log_std


# TODO(synk): evaluate()/get_action() sampling (Normal draws via pltpu.prng_*,
# tanh squash, log-prob) are not part of forward(); fusing them into this kernel
# would remove several XLA launches on the tiny-batch inference path.

if __name__ == "__main__":
    # Small shapes consistent with the module: state [batch, num_inputs].
    batch, num_inputs, num_actions, hidden_size = 8, 16, 4, 32

    key = jax.random.PRNGKey(0)
    k_state, k_params = jax.random.split(key)

    state = jax.random.normal(k_state, (batch, num_inputs), dtype=jnp.float32)
    params = init_params(k_params, num_inputs, num_actions, hidden_size)
    prepared = prepare_params(params)  # one-time padding / packing / bf16 cast

    mean, log_std = policy_forward(state, prepared, num_actions=num_actions)
    jax.block_until_ready((mean, log_std))

    assert mean.shape == (batch, num_actions)
    assert log_std.shape == (batch, num_actions)

    # Compare against a bf16-matched reference (tight-ish) and the f32
    # reference (loose: the kernel intentionally runs its matmuls in bf16).
    ref_mean_bf, ref_log_std_bf = reference_forward_bf16(state, params)
    ref_mean_f32, ref_log_std_f32 = reference_forward(state, params)

    assert jnp.allclose(mean, ref_mean_bf, atol=1e-2, rtol=1e-2)
    assert jnp.allclose(log_std, ref_log_std_bf, atol=1e-2, rtol=1e-2)
    assert jnp.allclose(mean, ref_mean_f32, atol=5e-2, rtol=5e-2)
    assert jnp.allclose(log_std, ref_log_std_f32, atol=5e-2, rtol=5e-2)

    print("KERNEL_OK")
</pallas_src>

<mosaic_0001>
module attributes {stable_mosaic.version = 11 : i64} {
  func.func @_policy_kernel(%arg0: i32, %arg1: memref<8x16xf32, #tpu.memory_space<vmem>>, %arg2: memref<16x256xbf16, #tpu.memory_space<vmem>>, %arg3: memref<256x768xbf16, #tpu.memory_space<vmem>>, %arg4: memref<4x256xf32, #tpu.memory_space<vmem>>, %arg5: memref<256x128xbf16, #tpu.memory_space<vmem>>, %arg6: memref<1x128xf32, #tpu.memory_space<vmem>>, %arg7: memref<8x128xf32, #tpu.memory_space<vmem>>) attributes {dimension_semantics = [#tpu.dimension_semantics<parallel>], iteration_bounds = array<i64: 1>, scalar_prefetch = 0 : i64, scratch_operands = 0 : i64, tpu.core_type = #tpu.core_type<tc>, window_params = [{transform_indices = @transform_0, window_bounds = array<i64: 8, 16>}, {pipeline_mode = #tpu.pipeline_mode<synchronous>, transform_indices = @transform_1, window_bounds = array<i64: 16, 256>}, {pipeline_mode = #tpu.pipeline_mode<synchronous>, transform_indices = @transform_2, window_bounds = array<i64: 256, 768>}, {pipeline_mode = #tpu.pipeline_mode<synchronous>, transform_indices = @transform_3, window_bounds = array<i64: 4, 256>}, {pipeline_mode = #tpu.pipeline_mode<synchronous>, transform_indices = @transform_4, window_bounds = array<i64: 256, 128>}, {pipeline_mode = #tpu.pipeline_mode<synchronous>, transform_indices = @transform_5, window_bounds = array<i64: 1, 128>}, {transform_indices = @transform_6, window_bounds = array<i64: 8, 128>}]} {
    %c0 = arith.constant 0 : index
    %c0_0 = arith.constant 0 : index
    %0 = vector.load %arg1[%c0, %c0_0] : memref<8x16xf32, #tpu.memory_space<vmem>>, vector<8x16xf32>
    %1 = arith.truncf %0 : vector<8x16xf32> to vector<8x16xbf16>
    %c0_1 = arith.constant 0 : index
    %c0_2 = arith.constant 0 : index
    %2 = vector.load %arg2[%c0_1, %c0_2] : memref<16x256xbf16, #tpu.memory_space<vmem>>, vector<16x256xbf16>
    %cst = arith.constant dense<0.000000e+00> : vector<8x256xf32>
    %3 = tpu.matmul %1, %2, %cst {dimension_numbers = #tpu.dot_dimension_numbers<[1], [0], [0], [1], [0, 0, 1, 1], [], []>} : vector<8x16xbf16>, vector<16x256xbf16>, vector<8x256xf32> -> vector<8x256xf32>
    %c0_3 = arith.constant 0 : index
    %c0_4 = arith.constant 0 : index
    %4 = vector.load %arg4[%c0_3, %c0_4] : memref<4x256xf32, #tpu.memory_space<vmem>>, vector<1x256xf32>
    %5 = vector.broadcast %4 : vector<1x256xf32> to vector<8x256xf32>
    %6 = arith.addf %3, %5 : vector<8x256xf32>
    %cst_5 = arith.constant 0.000000e+00 : f32
    %7 = vector.broadcast %cst_5 : f32 to vector<8x256xf32>
    %8 = arith.maximumf %6, %7 : vector<8x256xf32>
    %c0_6 = arith.constant 0 : index
    %c0_7 = arith.constant 0 : index
    %9 = vector.load %arg3[%c0_6, %c0_7] : memref<256x768xbf16, #tpu.memory_space<vmem>>, vector<256x256xbf16>
    %10 = arith.truncf %8 : vector<8x256xf32> to vector<8x256xbf16>
    %cst_8 = arith.constant dense<0.000000e+00> : vector<8x256xf32>
    %11 = tpu.matmul %10, %9, %cst_8 {dimension_numbers = #tpu.dot_dimension_numbers<[1], [0], [0], [1], [0, 0, 1, 1], [], []>} : vector<8x256xbf16>, vector<256x256xbf16>, vector<8x256xf32> -> vector<8x256xf32>
    %c1 = arith.constant 1 : index
    %c0_9 = arith.constant 0 : index
    %12 = vector.load %arg4[%c1, %c0_9] : memref<4x256xf32, #tpu.memory_space<vmem>>, vector<1x256xf32>
    %13 = vector.broadcast %12 : vector<1x256xf32> to vector<8x256xf32>
    %14 = arith.addf %11, %13 : vector<8x256xf32>
    %cst_10 = arith.constant 0.000000e+00 : f32
    %15 = vector.broadcast %cst_10 : f32 to vector<8x256xf32>
    %16 = arith.maximumf %14, %15 : vector<8x256xf32>
    %c0_11 = arith.constant 0 : index
    %c256 = arith.constant 256 : index
    %17 = vector.load %arg3[%c0_11, %c256] : memref<256x768xbf16, #tpu.memory_space<vmem>>, vector<256x256xbf16>
    %18 = arith.truncf %16 : vector<8x256xf32> to vector<8x256xbf16>
    %cst_12 = arith.constant dense<0.000000e+00> : vector<8x256xf32>
    %19 = tpu.matmul %18, %17, %cst_12 {dimension_numbers = #tpu.dot_dimension_numbers<[1], [0], [0], [1], [0, 0, 1, 1], [], []>} : vector<8x256xbf16>, vector<256x256xbf16>, vector<8x256xf32> -> vector<8x256xf32>
    %c2 = arith.constant 2 : index
    %c0_13 = arith.constant 0 : index
    %20 = vector.load %arg4[%c2, %c0_13] : memref<4x256xf32, #tpu.memory_space<vmem>>, vector<1x256xf32>
    %21 = vector.broadcast %20 : vector<1x256xf32> to vector<8x256xf32>
    %22 = arith.addf %19, %21 : vector<8x256xf32>
    %cst_14 = arith.constant 0.000000e+00 : f32
    %23 = vector.broadcast %cst_14 : f32 to vector<8x256xf32>
    %24 = arith.maximumf %22, %23 : vector<8x256xf32>
    %c0_15 = arith.constant 0 : index
    %c512 = arith.constant 512 : index
    %25 = vector.load %arg3[%c0_15, %c512] : memref<256x768xbf16, #tpu.memory_space<vmem>>, vector<256x256xbf16>
    %26 = arith.truncf %24 : vector<8x256xf32> to vector<8x256xbf16>
    %cst_16 = arith.constant dense<0.000000e+00> : vector<8x256xf32>
    %27 = tpu.matmul %26, %25, %cst_16 {dimension_numbers = #tpu.dot_dimension_numbers<[1], [0], [0], [1], [0, 0, 1, 1], [], []>} : vector<8x256xbf16>, vector<256x256xbf16>, vector<8x256xf32> -> vector<8x256xf32>
    %c3 = arith.constant 3 : index
    %c0_17 = arith.constant 0 : index
    %28 = vector.load %arg4[%c3, %c0_17] : memref<4x256xf32, #tpu.memory_space<vmem>>, vector<1x256xf32>
    %29 = vector.broadcast %28 : vector<1x256xf32> to vector<8x256xf32>
    %30 = arith.addf %27, %29 : vector<8x256xf32>
    %cst_18 = arith.constant 0.000000e+00 : f32
    %31 = vector.broadcast %cst_18 : f32 to vector<8x256xf32>
    %32 = arith.maximumf %30, %31 : vector<8x256xf32>
    %33 = arith.truncf %32 : vector<8x256xf32> to vector<8x256xbf16>
    %c0_19 = arith.constant 0 : index
    %c0_20 = arith.constant 0 : index
    %34 = vector.load %arg5[%c0_19, %c0_20] : memref<256x128xbf16, #tpu.memory_space<vmem>>, vector<256x128xbf16>
    %cst_21 = arith.constant dense<0.000000e+00> : vector<8x128xf32>
    %35 = tpu.matmul %33, %34, %cst_21 {dimension_numbers = #tpu.dot_dimension_numbers<[1], [0], [0], [1], [0, 0, 1, 1], [], []>} : vector<8x256xbf16>, vector<256x128xbf16>, vector<8x128xf32> -> vector<8x128xf32>
    %c0_22 = arith.constant 0 : index
    %c0_23 = arith.constant 0 : index
    %36 = vector.load %arg6[%c0_22, %c0_23] : memref<1x128xf32, #tpu.memory_space<vmem>>, vector<1x128xf32>
    %37 = vector.broadcast %36 : vector<1x128xf32> to vector<8x128xf32>
    %38 = arith.addf %35, %37 : vector<8x128xf32>
    %39 = tpu.iota {dimensions = array<i32: 1>} : vector<8x128xi32>
    %cst_24 = arith.constant -2.000000e+01 : f32
    %cst_25 = arith.constant 2.000000e+00 : f32
    %40 = vector.broadcast %cst_24 : f32 to vector<8x128xf32>
    %41 = arith.maximumf %40, %38 : vector<8x128xf32>
    %42 = vector.broadcast %cst_25 : f32 to vector<8x128xf32>
    %43 = arith.minimumf %42, %41 : vector<8x128xf32>
    %c4_i32 = arith.constant 4 : i32
    %44 = vector.broadcast %c4_i32 : i32 to vector<8x128xi32>
    %45 = arith.cmpi slt, %39, %44 : vector<8x128xi32>
    %46 = arith.select %45, %38, %43 : vector<8x128xi1>, vector<8x128xf32>
    %c0_26 = arith.constant 0 : index
    %c0_27 = arith.constant 0 : index
    %47 = vector.load %arg7[%c0_26, %c0_27] : memref<8x128xf32, #tpu.memory_space<vmem>>, vector<8x128xf32>
    tpu.vector_store %arg7[%c0_26, %c0_27], %46 {strides = array<i32>} : memref<8x128xf32, #tpu.memory_space<vmem>>, vector<8x128xf32>,
    return
  }
  func.func @transform_0(%arg0: i32) -> (i32, i32) {
    %c0_i32 = arith.constant 0 : i32
    %c0_i32_0 = arith.constant 0 : i32
    return %arg0, %c0_i32 : i32, i32
  }
  func.func @transform_1(%arg0: i32) -> (i32, i32) {
    %c0_i32 = arith.constant 0 : i32
    %c0_i32_0 = arith.constant 0 : i32
    %c0_i32_1 = arith.constant 0 : i32
    return %c0_i32, %c0_i32_0 : i32, i32
  }
  func.func @transform_2(%arg0: i32) -> (i32, i32) {
    %c0_i32 = arith.constant 0 : i32
    %c0_i32_0 = arith.constant 0 : i32
    %c0_i32_1 = arith.constant 0 : i32
    return %c0_i32, %c0_i32_0 : i32, i32
  }
  func.func @transform_3(%arg0: i32) -> (i32, i32) {
    %c0_i32 = arith.constant 0 : i32
    %c0_i32_0 = arith.constant 0 : i32
    %c0_i32_1 = arith.constant 0 : i32
    return %c0_i32, %c0_i32_0 : i32, i32
  }
  func.func @transform_4(%arg0: i32) -> (i32, i32) {
    %c0_i32 = arith.constant 0 : i32
    %c0_i32_0 = arith.constant 0 : i32
    %c0_i32_1 = arith.constant 0 : i32
    return %c0_i32, %c0_i32_0 : i32, i32
  }
  func.func @transform_5(%arg0: i32) -> (i32, i32) {
    %c0_i32 = arith.constant 0 : i32
    %c0_i32_0 = arith.constant 0 : i32
    %c0_i32_1 = arith.constant 0 : i32
    return %c0_i32, %c0_i32_0 : i32, i32
  }
  func.func @transform_6(%arg0: i32) -> (i32, i32) {
    %c0_i32 = arith.constant 0 : i32
    %c0_i32_0 = arith.constant 0 : i32
    return %arg0, %c0_i32 : i32, i32
  }
}

</mosaic_0001>

<llo_original>
// kernel: policy_forward.1
$region0: #{policy_forward.1}
  #allocation0 [shape = 'u32[]', space=smem, size = 0x4, offset = 0x4, fixed_abs, tag = 'smem constant byte address 0x4 - core index']
  #allocation1 [shape = 'u32[144,128]{1,0:T(1,128)}', space=vmem, size = 0x12000, scoped, tag = 'internal scratch']
  %s0 = inlined_call_operand.hbm [shape: f32[8,16], index: 0, kind: input, shape index: {}]
  %s1 = inlined_call_operand.hbm [shape: bf16[16,256], index: 1, kind: input, shape index: {}]
  %s2 = inlined_call_operand.hbm [shape: bf16[256,768], index: 2, kind: input, shape index: {}]
  %s3 = inlined_call_operand.hbm [shape: f32[4,256], index: 3, kind: input, shape index: {}]
  %s4 = inlined_call_operand.hbm [shape: bf16[256,128], index: 4, kind: input, shape index: {}]
  %s5 = inlined_call_operand.vmem [shape: f32[1,128], index: 5, kind: input, shape index: {}]
  %s6 = inlined_call_operand.vmem [shape: f32[8,128], index: 6, kind: output, shape index: {}]
  %s7 = sld [smem:[#allocation0]]
  $region54: #{policy_forward.1} parent=0
    _
  %s9 = ssub.s32 1, %s7
  %s10 = scalar_select 0, %s9, %s7
  $region1: #{policy_forward.1} parent=0
    #allocation2 [shape = 'u8[4096]{0}', space=vmem, size = 0x1000, scoped, tag = 'input window, operand 0, single buffered']
    #allocation3 [shape = 's32[1]{0}', space=sflag, size = 0x4, scoped, tag = 'scoped memory for policy_forward.1']
    #allocation4 [shape = 'u8[8192]{0}', space=vmem, size = 0x2000, scoped, tag = 'input window, operand 1, single buffered']
    #allocation5 [shape = 's32[1]{0}', space=sflag, size = 0x4, scoped, tag = 'scoped memory for policy_forward.1']
    #allocation6 [shape = 'u8[393216]{0}', space=vmem, size = 0x60000, scoped, tag = 'input window, operand 2, single buffered']
    #allocation7 [shape = 'u8[4096]{0}', space=vmem, size = 0x1000, scoped, tag = 'input window, operand 3, single buffered']
    #allocation8 [shape = 's32[1]{0}', space=sflag, size = 0x4, scoped, tag = 'scoped memory for policy_forward.1']
    #allocation9 [shape = 'u8[65536]{0}', space=vmem, size = 0x10000, scoped, tag = 'input window, operand 4, single buffered']
    %11 = vsyncpa [#allocation3], 0
    %12 = vsyncpa [#allocation5], 0
    %13 = vsyncpa [#allocation8], 0
    // Predicated region
    $region2: #{policy_forward.1} parent=1 // pred_check
      _
    $region3: #{policy_forward.1} parent=1 // pred_check_branch
      %15 = sbr.rel (0) target = $region5
    $region4: #{policy_forward.1} parent=1 // pred_region
      %s17 = ssub.s32 128, 128
      %18 = vsyncadd [#allocation3], %s17
      %s20 = sshll.u32 [#allocation2], 4
      %s21 = int_to_ptr.vmem [resolvable:$true] %s20
      %23 = dma.hbm_to_vmem [thread:$0]  %s0, 128, %s21, [#allocation3]
    $region5: #{policy_forward.1} parent=1 // pred_fallthru
      _
    // Predicated region
    $region6: #{policy_forward.1} parent=1 // pred_check
      _
    $region7: #{policy_forward.1} parent=1 // pred_check_branch
      %25 = sbr.rel (0) target = $region9
    $region8: #{policy_forward.1} parent=1 // pred_region
      %s27 = ssub.s32 256, 256
      %28 = vsyncadd [#allocation5], %s27
      %s29 = sshll.u32 [#allocation4], 4
      %s30 = int_to_ptr.vmem [resolvable:$true] %s29
      %35 = dma.hbm_to_vmem [thread:$0]  %s1, 256, %s30, [#allocation5], 128, 128, 8
    $region9: #{policy_forward.1} parent=1 // pred_fallthru
      _
    // Predicated region
    $region10: #{policy_forward.1} parent=1 // pred_check
      _
    $region11: #{policy_forward.1} parent=1 // pred_check_branch
      %37 = sbr.rel (0) target = $region13
    $region12: #{policy_forward.1} parent=1 // pred_region
      %s39 = ssub.s32 12288, 12288
      %40 = vsyncadd [#allocation5], %s39
      %s41 = sshll.u32 [#allocation6], 4
      %s42 = int_to_ptr.vmem [resolvable:$true] %s41
      %47 = dma.hbm_to_vmem [thread:$0]  %s2, 12288, %s42, [#allocation5], 384, 384, 24
    $region13: #{policy_forward.1} parent=1 // pred_fallthru
      _
    // Predicated region
    $region14: #{policy_forward.1} parent=1 // pred_check
      _
    $region15: #{policy_forward.1} parent=1 // pred_check_branch
      %49 = sbr.rel (0) target = $region17
    $region16: #{policy_forward.1} parent=1 // pred_region
      %s51 = ssub.s32 128, 128
      %52 = vsyncadd [#allocation8], %s51
      %s54 = sshll.u32 [#allocation7], 4
      %s55 = int_to_ptr.vmem [resolvable:$true] %s54
      %57 = dma.hbm_to_vmem [thread:$0]  %s3, 128, %s55, [#allocation8]
    $region17: #{policy_forward.1} parent=1 // pred_fallthru
      _
    // Predicated region
    $region18: #{policy_forward.1} parent=1 // pred_check
      _
    $region19: #{policy_forward.1} parent=1 // pred_check_branch
      %59 = sbr.rel (0) target = $region21
    $region20: #{policy_forward.1} parent=1 // pred_region
      %s61 = ssub.s32 2048, 2048
      %62 = vsyncadd [#allocation8], %s61
      %s63 = sshll.u32 [#allocation9], 4
      %s64 = int_to_ptr.vmem [resolvable:$true] %s63
      %69 = dma.hbm_to_vmem [thread:$0]  %s4, 2048, %s64, [#allocation8], 64, 64, 4
    $region21: #{policy_forward.1} parent=1 // pred_fallthru
      _
    // Predicated region
    $region22: #{policy_forward.1} parent=1 // pred_check
      _
    $region23: #{policy_forward.1} parent=1 // pred_check_branch
      %71 = sbr.rel (0) target = $region25
    $region24: #{policy_forward.1} parent=1 // pred_region
      _
    $region25: #{policy_forward.1} parent=1 // pred_fallthru
      _
    // Predicated region
    $region26: #{policy_forward.1} parent=1 // pred_check
      _
    $region27: #{policy_forward.1} parent=1 // pred_check_branch
      %73 = sbr.rel (0) target = $region29
    $region28: #{policy_forward.1} parent=1 // pred_region
      %74 = dma.done [#allocation3], 128
    $region29: #{policy_forward.1} parent=1 // pred_fallthru
      _
    // Predicated region
    $region30: #{policy_forward.1} parent=1 // pred_check
      _
    $region31: #{policy_forward.1} parent=1 // pred_check_branch
      %76 = sbr.rel (0) target = $region33
    $region32: #{policy_forward.1} parent=1 // pred_region
      %77 = dma.done [#allocation5], 256
    $region33: #{policy_forward.1} parent=1 // pred_fallthru
      _
    // Predicated region
    $region34: #{policy_forward.1} parent=1 // pred_check
      _
    $region35: #{policy_forward.1} parent=1 // pred_check_branch
      %79 = sbr.rel (0) target = $region37
    $region36: #{policy_forward.1} parent=1 // pred_region
      %80 = dma.done [#allocation5], 12288
    $region37: #{policy_forward.1} parent=1 // pred_fallthru
      _
    // Predicated region
    $region38: #{policy_forward.1} parent=1 // pred_check
      _
    $region39: #{policy_forward.1} parent=1 // pred_check_branch
      %82 = sbr.rel (0) target = $region41
    $region40: #{policy_forward.1} parent=1 // pred_region
      %83 = dma.done [#allocation8], 128
    $region41: #{policy_forward.1} parent=1 // pred_fallthru
      _
    // Predicated region
    $region42: #{policy_forward.1} parent=1 // pred_check
      _
    $region43: #{policy_forward.1} parent=1 // pred_check_branch
      %85 = sbr.rel (0) target = $region45
    $region44: #{policy_forward.1} parent=1 // pred_region
      %86 = dma.done [#allocation8], 2048
    $region45: #{policy_forward.1} parent=1 // pred_fallthru
      _
    %v88 = vld [vmem:[#allocation2] sm:$0xff]
    %v89 = vpack.c.bf16 %v88, %v88
    %v90 = vld [vmem:[#allocation4] sm:$0xff]
    %v91 = vld [vmem:[#allocation4 + $0x8] sm:$0xff]
    %v92 = vld [vmem:[#allocation7] ss:$4 sm:$0x3]
    %v94 = vlaneseq
    %v95 = vshrl.u32 %v94, 7
    %v96 = vsub.s32 0, %v95
    %v97 = vrot.slane %v92, %v96
    %v98 = vlaneseq
    %v99 = vshrl.u32 %v98, 7
    %v100 = vsub.s32 1, %v99
    %v101 = vrot.slane %v92, %v100
    %v106 = vunpack.c.l.b16 %v90
    %v107 = vunpack.c.h.b16 %v90
    %v108 = vunpack.c.l.b16 %v91
    %v109 = vunpack.c.h.b16 %v91
    %v110 = vpack.c.b16 %v108, %v106
    %v111 = vpack.c.b16 %v109, %v107
    %vm114 = vcmask 130048
    %v116 = vsel %vm114, %v89, 0
    %118 = vmatprep.subr.bf16.mxu0 0
    %119 = vmatpush1.bf16.msra.mxu0 0
    %120 = vmatprep.subr.bf16.mxu0 0
    %121 = vmatpush1.bf16.msra.mxu0 0
    %122 = vmatprep.subr.bf16.mxu0 0
    %123 = vmatpush1.bf16.msra.mxu0 0
    %124 = vmatprep.subr.bf16.mxu0 0
    %125 = vmatpush1.bf16.msra.mxu0 0
    %126 = vmatprep.subr.bf16.mxu0 0
    %127 = vmatpush1.bf16.msra.mxu0 0
    %128 = vmatprep.subr.bf16.mxu0 0
    %129 = vmatpush1.bf16.msra.mxu0 0
    %130 = vmatprep.subr.bf16.mxu0 0
    %131 = vmatpush1.bf16.msra.mxu0 0
    %132 = vmatprep.subr.bf16.mxu0 %v111
    %133 = vmatpush1.bf16.msra.mxu0 %v110
    %134 = vmatprep.subr.bf16.mxu0 0
    %135 = vmatpush2.bf16.msra.mxu0 0
    %136 = vmatprep.subr.bf16.mxu0 0
    %137 = vmatpush2.bf16.msra.mxu0 0
    %138 = vmatprep.subr.bf16.mxu0 0
    %139 = vmatpush2.bf16.msra.mxu0 0
    %140 = vmatprep.subr.bf16.mxu0 0
    %141 = vmatpush2.bf16.msra.mxu0 0
    %142 = vmatprep.subr.bf16.mxu0 0
    %143 = vmatpush2.bf16.msra.mxu0 0
    %144 = vmatprep.subr.bf16.mxu0 0
    %145 = vmatpush2.bf16.msra.mxu0 0
    %146 = vmatprep.subr.bf16.mxu0 0
    %147 = vmatpush2.bf16.msra.mxu0 0
    %148 = vmatprep.subr.bf16.mxu0 0
    %149 = vmatpush2.bf16.msra.mxu0 0
    %150 = vmatprep.mubr.bf16.mxu0 0
    %151 = vmatmul.mubr.bf16.gmra.mxu0 %v116
    %v152 = vpop.f32.mrf.mxu0
    %v153 = vadd.f32 %v97, %v152
    %v154 = vpop.f32.mrf.mxu0
    %v155 = vadd.f32 %v101, %v154
    %v156 = vpop.f32.mrf.mxu0
    %v157 = vpop.f32.mrf.mxu0
    %158 = vdwg.mxu0
    %v159 = vmax.f32 %v153, 0.0
    %v160 = vmax.f32 %v155, 0.0
    %v161 = vld [vmem:[#allocation6] sm:$0xff]
    %v162 = vld [vmem:[#allocation6 + $0x18] sm:$0xff]
    %v163 = vld [vmem:[#allocation6 + $0x30] sm:$0xff]
    %v164 = vld [vmem:[#allocation6 + $0x48] sm:$0xff]
    %v165 = vld [vmem:[#allocation6 + $0x60] sm:$0xff]
    %v166 = vld [vmem:[#allocation6 + $0x78] sm:$0xff]
    %v167 = vld [vmem:[#allocation6 + $0x90] sm:$0xff]
    %v168 = vld [vmem:[#allocation6 + $0xa8] sm:$0xff]
    %v169 = vld [vmem:[#allocation6 + $0xc0] sm:$0xff]
    %v170 = vld [vmem:[#allocation6 + $0xd8] sm:$0xff]
    %v171 = vld [vmem:[#allocation6 + $0xf0] sm:$0xff]
    %v172 = vld [vmem:[#allocation6 + $0x108] sm:$0xff]
    %v173 = vld [vmem:[#allocation6 + $0x120] sm:$0xff]
    %v174 = vld [vmem:[#allocation6 + $0x138] sm:$0xff]
    %v175 = vld [vmem:[#allocation6 + $0x150] sm:$0xff]
    %v176 = vld [vmem:[#allocation6 + $0x168] sm:$0xff]
    %v177 = vld [vmem:[#allocation6 + $0x180] sm:$0xff]
    %v178 = vld [vmem:[#allocation6 + $0x198] sm:$0xff]
    %v179 = vld [vmem:[#allocation6 + $0x1b0] sm:$0xff]
    %v180 = vld [vmem:[#allocation6 + $0x1c8] sm:$0xff]
    %v181 = vld [vmem:[#allocation6 + $0x1e0] sm:$0xff]
    %v182 = vld [vmem:[#allocation6 + $0x1f8] sm:$0xff]
    %v183 = vld [vmem:[#allocation6 + $0x210] sm:$0xff]
    %v184 = vld [vmem:[#allocation6 + $0x228] sm:$0xff]
    %v185 = vld [vmem:[#allocation6 + $0x240] sm:$0xff]
    %v186 = vld [vmem:[#allocation6 + $0x258] sm:$0xff]
    %v187 = vld [vmem:[#allocation6 + $0x270] sm:$0xff]
    %v188 = vld [vmem:[#allocation6 + $0x288] sm:$0xff]
    %v189 = vld [vmem:[#allocation6 + $0x2a0] sm:$0xff]
    %v190 = vld [vmem:[#allocation6 + $0x2b8] sm:$0xff]
    %v191 = vld [vmem:[#allocation6 + $0x2d0] sm:$0xff]
    %v192 = vld [vmem:[#allocation6 + $0x2e8] sm:$0xff]
    %v193 = vpack.c.bf16 %v159, %v159
    %v194 = vpack.c.bf16 %v160, %v160
    %s195 = scalar_lea.vmem [#allocation7], 1
    %v196 = vld [vmem:[%s195] ss:$4 sm:$0x3]
    %v198 = vlaneseq
    %v199 = vshrl.u32 %v198, 7
    %v200 = vsub.s32 0, %v199
    %v201 = vrot.slane %v196, %v200
    %v202 = vlaneseq
    %v203 = vshrl.u32 %v202, 7
    %v204 = vsub.s32 1, %v203
    %v205 = vrot.slane %v196, %v204
    %v240 = vunpack.c.l.b16 %v161
    %v241 = vunpack.c.h.b16 %v161
    %v242 = vunpack.c.l.b16 %v162
    %v243 = vunpack.c.h.b16 %v162
    %v244 = vunpack.c.l.b16 %v163
    %v245 = vunpack.c.h.b16 %v163
    %v246 = vunpack.c.l.b16 %v164
    %v247 = vunpack.c.h.b16 %v164
    %v248 = vunpack.c.l.b16 %v165
    %v249 = vunpack.c.h.b16 %v165
    %v250 = vunpack.c.l.b16 %v166
    %v251 = vunpack.c.h.b16 %v166
    %v252 = vunpack.c.l.b16 %v167
    %v253 = vunpack.c.h.b16 %v167
    %v254 = vunpack.c.l.b16 %v168
    %v255 = vunpack.c.h.b16 %v168
    %v256 = vunpack.c.l.b16 %v169
    %v257 = vunpack.c.h.b16 %v169
    %v258 = vunpack.c.l.b16 %v170
    %v259 = vunpack.c.h.b16 %v170
    %v260 = vunpack.c.l.b16 %v171
    %v261 = vunpack.c.h.b16 %v171
    %v262 = vunpack.c.l.b16 %v172
    %v263 = vunpack.c.h.b16 %v172
    %v264 = vunpack.c.l.b16 %v173
    %v265 = vunpack.c.h.b16 %v173
    %v266 = vunpack.c.l.b16 %v174
    %v267 = vunpack.c.h.b16 %v174
    %v268 = vunpack.c.l.b16 %v175
    %v269 = vunpack.c.h.b16 %v175
    %v270 = vunpack.c.l.b16 %v176
    %v271 = vunpack.c.h.b16 %v176
    %v272 = vunpack.c.l.b16 %v177
    %v273 = vunpack.c.h.b16 %v177
    %v274 = vunpack.c.l.b16 %v178
    %v275 = vunpack.c.h.b16 %v178
    %v276 = vunpack.c.l.b16 %v179
    %v277 = vunpack.c.h.b16 %v179
    %v278 = vunpack.c.l.b16 %v180
    %v279 = vunpack.c.h.b16 %v180
    %v280 = vunpack.c.l.b16 %v181
    %v281 = vunpack.c.h.b16 %v181
    %v282 = vunpack.c.l.b16 %v182
    %v283 = vunpack.c.h.b16 %v182
    %v284 = vunpack.c.l.b16 %v183
    %v285 = vunpack.c.h.b16 %v183
    %v286 = vunpack.c.l.b16 %v184
    %v287 = vunpack.c.h.b16 %v184
    %v288 = vunpack.c.l.b16 %v185
    %v289 = vunpack.c.h.b16 %v185
    %v290 = vunpack.c.l.b16 %v186
    %v291 = vunpack.c.h.b16 %v186
    %v292 = vunpack.c.l.b16 %v187
    %v293 = vunpack.c.h.b16 %v187
    %v294 = vunpack.c.l.b16 %v188
    %v295 = vunpack.c.h.b16 %v188
    %v296 = vunpack.c.l.b16 %v189
    %v297 = vunpack.c.h.b16 %v189
    %v298 = vunpack.c.l.b16 %v190
    %v299 = vunpack.c.h.b16 %v190
    %v300 = vunpack.c.l.b16 %v191
    %v301 = vunpack.c.h.b16 %v191
    %v302 = vunpack.c.l.b16 %v192
    %v303 = vunpack.c.h.b16 %v192
    %v304 = vpack.c.b16 %v242, %v240
    %v305 = vpack.c.b16 %v243, %v241
    %v306 = vpack.c.b16 %v246, %v244
    %v307 = vpack.c.b16 %v247, %v245
    %v308 = vpack.c.b16 %v250, %v248
    %v309 = vpack.c.b16 %v251, %v249
    %v310 = vpack.c.b16 %v254, %v252
    %v311 = vpack.c.b16 %v255, %v253
    %v312 = vpack.c.b16 %v258, %v256
    %v313 = vpack.c.b16 %v259, %v257
    %v314 = vpack.c.b16 %v262, %v260
    %v315 = vpack.c.b16 %v263, %v261
    %v316 = vpack.c.b16 %v266, %v264
    %v317 = vpack.c.b16 %v267, %v265
    %v318 = vpack.c.b16 %v270, %v268
    %v319 = vpack.c.b16 %v271, %v269
    %v320 = vpack.c.b16 %v274, %v272
    %v321 = vpack.c.b16 %v275, %v273
    %v322 = vpack.c.b16 %v278, %v276
    %v323 = vpack.c.b16 %v279, %v277
    %v324 = vpack.c.b16 %v282, %v280
    %v325 = vpack.c.b16 %v283, %v281
    %v326 = vpack.c.b16 %v286, %v284
    %v327 = vpack.c.b16 %v287, %v285
    %v328 = vpack.c.b16 %v290, %v288
    %v329 = vpack.c.b16 %v291, %v289
    %v330 = vpack.c.b16 %v294, %v292
    %v331 = vpack.c.b16 %v295, %v293
    %v332 = vpack.c.b16 %v298, %v296
    %v333 = vpack.c.b16 %v299, %v297
    %v334 = vpack.c.b16 %v302, %v300
    %v335 = vpack.c.b16 %v303, %v301
    %368 = vmatprep.subr.bf16.mxu0 %v319
    %369 = vmatpush1.bf16.msra.mxu0 %v318
    %370 = vmatprep.subr.bf16.mxu0 %v317
    %371 = vmatpush1.bf16.msra.mxu0 %v316
    %372 = vmatprep.subr.bf16.mxu0 %v315
    %373 = vmatpush1.bf16.msra.mxu0 %v314
    %374 = vmatprep.subr.bf16.mxu0 %v313
    %375 = vmatpush1.bf16.msra.mxu0 %v312
    %376 = vmatprep.subr.bf16.mxu0 %v311
    %377 = vmatpush1.bf16.msra.mxu0 %v310
    %378 = vmatprep.subr.bf16.mxu0 %v309
    %379 = vmatpush1.bf16.msra.mxu0 %v308
    %380 = vmatprep.subr.bf16.mxu0 %v307
    %381 = vmatpush1.bf16.msra.mxu0 %v306
    %382 = vmatprep.subr.bf16.mxu0 %v305
    %383 = vmatpush1.bf16.msra.mxu0 %v304
    %384 = vmatprep.subr.bf16.mxu0 %v335
    %385 = vmatpush2.bf16.msra.mxu0 %v334
    %386 = vmatprep.subr.bf16.mxu0 %v333
    %387 = vmatpush2.bf16.msra.mxu0 %v332
    %388 = vmatprep.subr.bf16.mxu0 %v331
    %389 = vmatpush2.bf16.msra.mxu0 %v330
    %390 = vmatprep.subr.bf16.mxu0 %v329
    %391 = vmatpush2.bf16.msra.mxu0 %v328
    %392 = vmatprep.subr.bf16.mxu0 %v327
    %393 = vmatpush2.bf16.msra.mxu0 %v326
    %394 = vmatprep.subr.bf16.mxu0 %v325
    %395 = vmatpush2.bf16.msra.mxu0 %v324
    %396 = vmatprep.subr.bf16.mxu0 %v323
    %397 = vmatpush2.bf16.msra.mxu0 %v322
    %398 = vmatprep.subr.bf16.mxu0 %v321
    %399 = vmatpush2.bf16.msra.mxu0 %v320
    %400 = vmatprep.mubr.bf16.mxu0 %v194
    %401 = vmatmul.mubr.bf16.gmra.mxu0 %v193
    %v402 = vpop.f32.mrf.mxu0
    %v403 = vadd.f32 %v201, %v402
    %v404 = vpop.f32.mrf.mxu0
    %v405 = vadd.f32 %v205, %v404
    %v406 = vpop.f32.mrf.mxu0
    %v407 = vpop.f32.mrf.mxu0
    %408 = vdwg.mxu0
    %v409 = vmax.f32 %v403, 0.0
    %v410 = vmax.f32 %v405, 0.0
    %v411 = vld [vmem:[#allocation6 + $0x8] sm:$0xff]
    %v412 = vld [vmem:[#allocation6 + $0x20] sm:$0xff]
    %v413 = vld [vmem:[#allocation6 + $0x38] sm:$0xff]
    %v414 = vld [vmem:[#allocation6 + $0x50] sm:$0xff]
    %v415 = vld [vmem:[#allocation6 + $0x68] sm:$0xff]
    %v416 = vld [vmem:[#allocation6 + $0x80] sm:$0xff]
    %v417 = vld [vmem:[#allocation6 + $0x98] sm:$0xff]
    %v418 = vld [vmem:[#allocation6 + $0xb0] sm:$0xff]
    %v419 = vld [vmem:[#allocation6 + $0xc8] sm:$0xff]
    %v420 = vld [vmem:[#allocation6 + $0xe0] sm:$0xff]
    %v421 = vld [vmem:[#allocation6 + $0xf8] sm:$0xff]
    %v422 = vld [vmem:[#allocation6 + $0x110] sm:$0xff]
    %v423 = vld [vmem:[#allocation6 + $0x128] sm:$0xff]
    %v424 = vld [vmem:[#allocation6 + $0x140] sm:$0xff]
    %v425 = vld [vmem:[#allocation6 + $0x158] sm:$0xff]
    %v426 = vld [vmem:[#allocation6 + $0x170] sm:$0xff]
    %v427 = vld [vmem:[#allocation6 + $0x188] sm:$0xff]
    %v428 = vld [vmem:[#allocation6 + $0x1a0] sm:$0xff]
    %v429 = vld [vmem:[#allocation6 + $0x1b8] sm:$0xff]
    %v430 = vld [vmem:[#allocation6 + $0x1d0] sm:$0xff]
    %v431 = vld [vmem:[#allocation6 + $0x1e8] sm:$0xff]
    %v432 = vld [vmem:[#allocation6 + $0x200] sm:$0xff]
    %v433 = vld [vmem:[#allocation6 + $0x218] sm:$0xff]
    %v434 = vld [vmem:[#allocation6 + $0x230] sm:$0xff]
    %v435 = vld [vmem:[#allocation6 + $0x248] sm:$0xff]
    %v436 = vld [vmem:[#allocation6 + $0x260] sm:$0xff]
    %v437 = vld [vmem:[#allocation6 + $0x278] sm:$0xff]
    %v438 = vld [vmem:[#allocation6 + $0x290] sm:$0xff]
    %v439 = vld [vmem:[#allocation6 + $0x2a8] sm:$0xff]
    %v440 = vld [vmem:[#allocation6 + $0x2c0] sm:$0xff]
    %v441 = vld [vmem:[#allocation6 + $0x2d8] sm:$0xff]
    %v442 = vld [vmem:[#allocation6 + $0x2f0] sm:$0xff]
    %v443 = vpack.c.bf16 %v409, %v409
    %v444 = vpack.c.bf16 %v410, %v410
    %s445 = scalar_lea.vmem [#allocation7], 2
    %v446 = vld [vmem:[%s445] ss:$4 sm:$0x3]
    %v448 = vlaneseq
    %v449 = vshrl.u32 %v448, 7
    %v450 = vsub.s32 0, %v449
    %v451 = vrot.slane %v446, %v450
    %v452 = vlaneseq
    %v453 = vshrl.u32 %v452, 7
    %v454 = vsub.s32 1, %v453
    %v455 = vrot.slane %v446, %v454
    %v490 = vunpack.c.l.b16 %v411
    %v491 = vunpack.c.h.b16 %v411
    %v492 = vunpack.c.l.b16 %v412
    %v493 = vunpack.c.h.b16 %v412
    %v494 = vunpack.c.l.b16 %v413
    %v495 = vunpack.c.h.b16 %v413
    %v496 = vunpack.c.l.b16 %v414
    %v497 = vunpack.c.h.b16 %v414
    %v498 = vunpack.c.l.b16 %v415
    %v499 = vunpack.c.h.b16 %v415
    %v500 = vunpack.c.l.b16 %v416
    %v501 = vunpack.c.h.b16 %v416
    %v502 = vunpack.c.l.b16 %v417
    %v503 = vunpack.c.h.b16 %v417
    %v504 = vunpack.c.l.b16 %v418
    %v505 = vunpack.c.h.b16 %v418
    %v506 = vunpack.c.l.b16 %v419
    %v507 = vunpack.c.h.b16 %v419
    %v508 = vunpack.c.l.b16 %v420
    %v509 = vunpack.c.h.b16 %v420
    %v510 = vunpack.c.l.b16 %v421
    %v511 = vunpack.c.h.b16 %v421
    %v512 = vunpack.c.l.b16 %v422
    %v513 = vunpack.c.h.b16 %v422
    %v514 = vunpack.c.l.b16 %v423
    %v515 = vunpack.c.h.b16 %v423
    %v516 = vunpack.c.l.b16 %v424
    %v517 = vunpack.c.h.b16 %v424
    %v518 = vunpack.c.l.b16 %v425
    %v519 = vunpack.c.h.b16 %v425
    %v520 = vunpack.c.l.b16 %v426
    %v521 = vunpack.c.h.b16 %v426
    %v522 = vunpack.c.l.b16 %v427
    %v523 = vunpack.c.h.b16 %v427
    %v524 = vunpack.c.l.b16 %v428
    %v525 = vunpack.c.h.b16 %v428
    %v526 = vunpack.c.l.b16 %v429
    %v527 = vunpack.c.h.b16 %v429
    %v528 = vunpack.c.l.b16 %v430
    %v529 = vunpack.c.h.b16 %v430
    %v530 = vunpack.c.l.b16 %v431
    %v531 = vunpack.c.h.b16 %v431
    %v532 = vunpack.c.l.b16 %v432
    %v533 = vunpack.c.h.b16 %v432
    %v534 = vunpack.c.l.b16 %v433
    %v535 = vunpack.c.h.b16 %v433
    %v536 = vunpack.c.l.b16 %v434
    %v537 = vunpack.c.h.b16 %v434
    %v538 = vunpack.c.l.b16 %v435
    %v539 = vunpack.c.h.b16 %v435
    %v540 = vunpack.c.l.b16 %v436
    %v541 = vunpack.c.h.b16 %v436
    %v542 = vunpack.c.l.b16 %v437
    %v543 = vunpack.c.h.b16 %v437
    %v544 = vunpack.c.l.b16 %v438
    %v545 = vunpack.c.h.b16 %v438
    %v546 = vunpack.c.l.b16 %v439
    %v547 = vunpack.c.h.b16 %v439
    %v548 = vunpack.c.l.b16 %v440
    %v549 = vunpack.c.h.b16 %v440
    %v550 = vunpack.c.l.b16 %v441
    %v551 = vunpack.c.h.b16 %v441
    %v552 = vunpack.c.l.b16 %v442
    %v553 = vunpack.c.h.b16 %v442
    %v554 = vpack.c.b16 %v492, %v490
    %v555 = vpack.c.b16 %v493, %v491
    %v556 = vpack.c.b16 %v496, %v494
    %v557 = vpack.c.b16 %v497, %v495
    %v558 = vpack.c.b16 %v500, %v498
    %v559 = vpack.c.b16 %v501, %v499
    %v560 = vpack.c.b16 %v504, %v502
    %v561 = vpack.c.b16 %v505, %v503
    %v562 = vpack.c.b16 %v508, %v506
    %v563 = vpack.c.b16 %v509, %v507
    %v564 = vpack.c.b16 %v512, %v510
    %v565 = vpack.c.b16 %v513, %v511
    %v566 = vpack.c.b16 %v516, %v514
    %v567 = vpack.c.b16 %v517, %v515
    %v568 = vpack.c.b16 %v520, %v518
    %v569 = vpack.c.b16 %v521, %v519
    %v570 = vpack.c.b16 %v524, %v522
    %v571 = vpack.c.b16 %v525, %v523
    %v572 = vpack.c.b16 %v528, %v526
    %v573 = vpack.c.b16 %v529, %v527
    %v574 = vpack.c.b16 %v532, %v530
    %v575 = vpack.c.b16 %v533, %v531
    %v576 = vpack.c.b16 %v536, %v534
    %v577 = vpack.c.b16 %v537, %v535
    %v578 = vpack.c.b16 %v540, %v538
    %v579 = vpack.c.b16 %v541, %v539
    %v580 = vpack.c.b16 %v544, %v542
    %v581 = vpack.c.b16 %v545, %v543
    %v582 = vpack.c.b16 %v548, %v546
    %v583 = vpack.c.b16 %v549, %v547
    %v584 = vpack.c.b16 %v552, %v550
    %v585 = vpack.c.b16 %v553, %v551
    %618 = vmatprep.subr.bf16.mxu0 %v569
    %619 = vmatpush1.bf16.msra.mxu0 %v568
    %620 = vmatprep.subr.bf16.mxu0 %v567
    %621 = vmatpush1.bf16.msra.mxu0 %v566
    %622 = vmatprep.subr.bf16.mxu0 %v565
    %623 = vmatpush1.bf16.msra.mxu0 %v564
    %624 = vmatprep.subr.bf16.mxu0 %v563
    %625 = vmatpush1.bf16.msra.mxu0 %v562
    %626 = vmatprep.subr.bf16.mxu0 %v561
    %627 = vmatpush1.bf16.msra.mxu0 %v560
    %628 = vmatprep.subr.bf16.mxu0 %v559
    %629 = vmatpush1.bf16.msra.mxu0 %v558
    %630 = vmatprep.subr.bf16.mxu0 %v557
    %631 = vmatpush1.bf16.msra.mxu0 %v556
    %632 = vmatprep.subr.bf16.mxu0 %v555
    %633 = vmatpush1.bf16.msra.mxu0 %v554
    %634 = vmatprep.subr.bf16.mxu0 %v585
    %635 = vmatpush2.bf16.msra.mxu0 %v584
    %636 = vmatprep.subr.bf16.mxu0 %v583
    %637 = vmatpush2.bf16.msra.mxu0 %v582
    %638 = vmatprep.subr.bf16.mxu0 %v581
    %639 = vmatpush2.bf16.msra.mxu0 %v580
    %640 = vmatprep.subr.bf16.mxu0 %v579
    %641 = vmatpush2.bf16.msra.mxu0 %v578
    %642 = vmatprep.subr.bf16.mxu0 %v577
    %643 = vmatpush2.bf16.msra.mxu0 %v576
    %644 = vmatprep.subr.bf16.mxu0 %v575
    %645 = vmatpush2.bf16.msra.mxu0 %v574
    %646 = vmatprep.subr.bf16.mxu0 %v573
    %647 = vmatpush2.bf16.msra.mxu0 %v572
    %648 = vmatprep.subr.bf16.mxu0 %v571
    %649 = vmatpush2.bf16.msra.mxu0 %v570
    %650 = vmatprep.mubr.bf16.mxu0 %v444
    %651 = vmatmul.mubr.bf16.gmra.mxu0 %v443
    %v652 = vpop.f32.mrf.mxu0
    %v653 = vadd.f32 %v451, %v652
    %v654 = vpop.f32.mrf.mxu0
    %v655 = vadd.f32 %v455, %v654
    %v656 = vpop.f32.mrf.mxu0
    %v657 = vpop.f32.mrf.mxu0
    %658 = vdwg.mxu0
    %v659 = vmax.f32 %v653, 0.0
    %v660 = vmax.f32 %v655, 0.0
    %v661 = vld [vmem:[#allocation6 + $0x10] sm:$0xff]
    %v662 = vld [vmem:[#allocation6 + $0x28] sm:$0xff]
    %v663 = vld [vmem:[#allocation6 + $0x40] sm:$0xff]
    %v664 = vld [vmem:[#allocation6 + $0x58] sm:$0xff]
    %v665 = vld [vmem:[#allocation6 + $0x70] sm:$0xff]
    %v666 = vld [vmem:[#allocation6 + $0x88] sm:$0xff]
    %v667 = vld [vmem:[#allocation6 + $0xa0] sm:$0xff]
    %v668 = vld [vmem:[#allocation6 + $0xb8] sm:$0xff]
    %v669 = vld [vmem:[#allocation6 + $0xd0] sm:$0xff]
    %v670 = vld [vmem:[#allocation6 + $0xe8] sm:$0xff]
    %v671 = vld [vmem:[#allocation6 + $0x100] sm:$0xff]
    %v672 = vld [vmem:[#allocation6 + $0x118] sm:$0xff]
    %v673 = vld [vmem:[#allocation6 + $0x130] sm:$0xff]
    %v674 = vld [vmem:[#allocation6 + $0x148] sm:$0xff]
    %v675 = vld [vmem:[#allocation6 + $0x160] sm:$0xff]
    %v676 = vld [vmem:[#allocation6 + $0x178] sm:$0xff]
    %v677 = vld [vmem:[#allocation6 + $0x190] sm:$0xff]
    %v678 = vld [vmem:[#allocation6 + $0x1a8] sm:$0xff]
    %v679 = vld [vmem:[#allocation6 + $0x1c0] sm:$0xff]
    %v680 = vld [vmem:[#allocation6 + $0x1d8] sm:$0xff]
    %v681 = vld [vmem:[#allocation6 + $0x1f0] sm:$0xff]
    %v682 = vld [vmem:[#allocation6 + $0x208] sm:$0xff]
    %v683 = vld [vmem:[#allocation6 + $0x220] sm:$0xff]
    %v684 = vld [vmem:[#allocation6 + $0x238] sm:$0xff]
    %v685 = vld [vmem:[#allocation6 + $0x250] sm:$0xff]
    %v686 = vld [vmem:[#allocation6 + $0x268] sm:$0xff]
    %v687 = vld [vmem:[#allocation6 + $0x280] sm:$0xff]
    %v688 = vld [vmem:[#allocation6 + $0x298] sm:$0xff]
    %v689 = vld [vmem:[#allocation6 + $0x2b0] sm:$0xff]
    %v690 = vld [vmem:[#allocation6 + $0x2c8] sm:$0xff]
    %v691 = vld [vmem:[#allocation6 + $0x2e0] sm:$0xff]
    %v692 = vld [vmem:[#allocation6 + $0x2f8] sm:$0xff]
    %v693 = vpack.c.bf16 %v659, %v659
    %v694 = vpack.c.bf16 %v660, %v660
    %s695 = scalar_lea.vmem [#allocation7], 3
    %v696 = vld [vmem:[%s695] ss:$4 sm:$0x3]
    %v698 = vlaneseq
    %v699 = vshrl.u32 %v698, 7
    %v700 = vsub.s32 0, %v699
    %v701 = vrot.slane %v696, %v700
    %v702 = vlaneseq
    %v703 = vshrl.u32 %v702, 7
    %v704 = vsub.s32 1, %v703
    %v705 = vrot.slane %v696, %v704
    %v740 = vunpack.c.l.b16 %v661
    %v741 = vunpack.c.h.b16 %v661
    %v742 = vunpack.c.l.b16 %v662
    %v743 = vunpack.c.h.b16 %v662
    %v744 = vunpack.c.l.b16 %v663
    %v745 = vunpack.c.h.b16 %v663
    %v746 = vunpack.c.l.b16 %v664
    %v747 = vunpack.c.h.b16 %v664
    %v748 = vunpack.c.l.b16 %v665
    %v749 = vunpack.c.h.b16 %v665
    %v750 = vunpack.c.l.b16 %v666
    %v751 = vunpack.c.h.b16 %v666
    %v752 = vunpack.c.l.b16 %v667
    %v753 = vunpack.c.h.b16 %v667
    %v754 = vunpack.c.l.b16 %v668
    %v755 = vunpack.c.h.b16 %v668
    %v756 = vunpack.c.l.b16 %v669
    %v757 = vunpack.c.h.b16 %v669
    %v758 = vunpack.c.l.b16 %v670
    %v759 = vunpack.c.h.b16 %v670
    %v760 = vunpack.c.l.b16 %v671
    %v761 = vunpack.c.h.b16 %v671
    %v762 = vunpack.c.l.b16 %v672
    %v763 = vunpack.c.h.b16 %v672
    %v764 = vunpack.c.l.b16 %v673
    %v765 = vunpack.c.h.b16 %v673
    %v766 = vunpack.c.l.b16 %v674
    %v767 = vunpack.c.h.b16 %v674
    %v768 = vunpack.c.l.b16 %v675
    %v769 = vunpack.c.h.b16 %v675
    %v770 = vunpack.c.l.b16 %v676
    %v771 = vunpack.c.h.b16 %v676
    %v772 = vunpack.c.l.b16 %v677
    %v773 = vunpack.c.h.b16 %v677
    %v774 = vunpack.c.l.b16 %v678
    %v775 = vunpack.c.h.b16 %v678
    %v776 = vunpack.c.l.b16 %v679
    %v777 = vunpack.c.h.b16 %v679
    %v778 = vunpack.c.l.b16 %v680
    %v779 = vunpack.c.h.b16 %v680
    %v780 = vunpack.c.l.b16 %v681
    %v781 = vunpack.c.h.b16 %v681
    %v782 = vunpack.c.l.b16 %v682
    %v783 = vunpack.c.h.b16 %v682
    %v784 = vunpack.c.l.b16 %v683
    %v785 = vunpack.c.h.b16 %v683
    %v786 = vunpack.c.l.b16 %v684
    %v787 = vunpack.c.h.b16 %v684
    %v788 = vunpack.c.l.b16 %v685
    %v789 = vunpack.c.h.b16 %v685
    %v790 = vunpack.c.l.b16 %v686
    %v791 = vunpack.c.h.b16 %v686
    %v792 = vunpack.c.l.b16 %v687
    %v793 = vunpack.c.h.b16 %v687
    %v794 = vunpack.c.l.b16 %v688
    %v795 = vunpack.c.h.b16 %v688
    %v796 = vunpack.c.l.b16 %v689
    %v797 = vunpack.c.h.b16 %v689
    %v798 = vunpack.c.l.b16 %v690
    %v799 = vunpack.c.h.b16 %v690
    %v800 = vunpack.c.l.b16 %v691
    %v801 = vunpack.c.h.b16 %v691
    %v802 = vunpack.c.l.b16 %v692
    %v803 = vunpack.c.h.b16 %v692
    %v804 = vpack.c.b16 %v742, %v740
    %v805 = vpack.c.b16 %v743, %v741
    %v806 = vpack.c.b16 %v746, %v744
    %v807 = vpack.c.b16 %v747, %v745
    %v808 = vpack.c.b16 %v750, %v748
    %v809 = vpack.c.b16 %v751, %v749
    %v810 = vpack.c.b16 %v754, %v752
    %v811 = vpack.c.b16 %v755, %v753
    %v812 = vpack.c.b16 %v758, %v756
    %v813 = vpack.c.b16 %v759, %v757
    %v814 = vpack.c.b16 %v762, %v760
    %v815 = vpack.c.b16 %v763, %v761
    %v816 = vpack.c.b16 %v766, %v764
    %v817 = vpack.c.b16 %v767, %v765
    %v818 = vpack.c.b16 %v770, %v768
    %v819 = vpack.c.b16 %v771, %v769
    %v820 = vpack.c.b16 %v774, %v772
    %v821 = vpack.c.b16 %v775, %v773
    %v822 = vpack.c.b16 %v778, %v776
    %v823 = vpack.c.b16 %v779, %v777
    %v824 = vpack.c.b16 %v782, %v780
    %v825 = vpack.c.b16 %v783, %v781
    %v826 = vpack.c.b16 %v786, %v784
    %v827 = vpack.c.b16 %v787, %v785
    %v828 = vpack.c.b16 %v790, %v788
    %v829 = vpack.c.b16 %v791, %v789
    %v830 = vpack.c.b16 %v794, %v792
    %v831 = vpack.c.b16 %v795, %v793
    %v832 = vpack.c.b16 %v798, %v796
    %v833 = vpack.c.b16 %v799, %v797
    %v834 = vpack.c.b16 %v802, %v800
    %v835 = vpack.c.b16 %v803, %v801
    %868 = vmatprep.subr.bf16.mxu0 %v819
    %869 = vmatpush1.bf16.msra.mxu0 %v818
    %870 = vmatprep.subr.bf16.mxu0 %v817
    %871 = vmatpush1.bf16.msra.mxu0 %v816
    %872 = vmatprep.subr.bf16.mxu0 %v815
    %873 = vmatpush1.bf16.msra.mxu0 %v814
    %874 = vmatprep.subr.bf16.mxu0 %v813
    %875 = vmatpush1.bf16.msra.mxu0 %v812
    %876 = vmatprep.subr.bf16.mxu0 %v811
    %877 = vmatpush1.bf16.msra.mxu0 %v810
    %878 = vmatprep.subr.bf16.mxu0 %v809
    %879 = vmatpush1.bf16.msra.mxu0 %v808
    %880 = vmatprep.subr.bf16.mxu0 %v807
    %881 = vmatpush1.bf16.msra.mxu0 %v806
    %882 = vmatprep.subr.bf16.mxu0 %v805
    %883 = vmatpush1.bf16.msra.mxu0 %v804
    %884 = vmatprep.subr.bf16.mxu0 %v835
    %885 = vmatpush2.bf16.msra.mxu0 %v834
    %886 = vmatprep.subr.bf16.mxu0 %v833
    %887 = vmatpush2.bf16.msra.mxu0 %v832
    %888 = vmatprep.subr.bf16.mxu0 %v831
    %889 = vmatpush2.bf16.msra.mxu0 %v830
    %890 = vmatprep.subr.bf16.mxu0 %v829
    %891 = vmatpush2.bf16.msra.mxu0 %v828
    %892 = vmatprep.subr.bf16.mxu0 %v827
    %893 = vmatpush2.bf16.msra.mxu0 %v826
    %894 = vmatprep.subr.bf16.mxu0 %v825
    %895 = vmatpush2.bf16.msra.mxu0 %v824
    %896 = vmatprep.subr.bf16.mxu0 %v823
    %897 = vmatpush2.bf16.msra.mxu0 %v822
    %898 = vmatprep.subr.bf16.mxu0 %v821
    %899 = vmatpush2.bf16.msra.mxu0 %v820
    %900 = vmatprep.mubr.bf16.mxu0 %v694
    %901 = vmatmul.mubr.bf16.gmra.mxu0 %v693
    %v902 = vpop.f32.mrf.mxu0
    %v903 = vadd.f32 %v701, %v902
    %v904 = vpop.f32.mrf.mxu0
    %v905 = vadd.f32 %v705, %v904
    %v906 = vpop.f32.mrf.mxu0
    %v907 = vpop.f32.mrf.mxu0
    %908 = vdwg.mxu0
    %v909 = vmax.f32 %v903, 0.0
    %v910 = vmax.f32 %v905, 0.0
    %v911 = vpack.c.bf16 %v909, %v909
    %v912 = vpack.c.bf16 %v910, %v910
    %v913 = vld [vmem:[#allocation9] sm:$0xf]
    %v914 = vld [vmem:[#allocation9 + $0x4] sm:$0xf]
    %v915 = vld [vmem:[#allocation9 + $0x8] sm:$0xf]
    %v916 = vld [vmem:[#allocation9 + $0xc] sm:$0xf]
    %v917 = vld [vmem:[#allocation9 + $0x10] sm:$0xf]
    %v918 = vld [vmem:[#allocation9 + $0x14] sm:$0xf]
    %v919 = vld [vmem:[#allocation9 + $0x18] sm:$0xf]
    %v920 = vld [vmem:[#allocation9 + $0x1c] sm:$0xf]
    %v921 = vld [vmem:[#allocation9 + $0x20] sm:$0xf]
    %v922 = vld [vmem:[#allocation9 + $0x24] sm:$0xf]
    %v923 = vld [vmem:[#allocation9 + $0x28] sm:$0xf]
    %v924 = vld [vmem:[#allocation9 + $0x2c] sm:$0xf]
    %v925 = vld [vmem:[#allocation9 + $0x30] sm:$0xf]
    %v926 = vld [vmem:[#allocation9 + $0x34] sm:$0xf]
    %v927 = vld [vmem:[#allocation9 + $0x38] sm:$0xf]
    %v928 = vld [vmem:[#allocation9 + $0x3c] sm:$0xf]
    %v929 = vld [vmem:[#allocation9 + $0x40] sm:$0xf]
    %v930 = vld [vmem:[#allocation9 + $0x44] sm:$0xf]
    %v931 = vld [vmem:[#allocation9 + $0x48] sm:$0xf]
    %v932 = vld [vmem:[#allocation9 + $0x4c] sm:$0xf]
    %v933 = vld [vmem:[#allocation9 + $0x50] sm:$0xf]
    %v934 = vld [vmem:[#allocation9 + $0x54] sm:$0xf]
    %v935 = vld [vmem:[#allocation9 + $0x58] sm:$0xf]
    %v936 = vld [vmem:[#allocation9 + $0x5c] sm:$0xf]
    %v937 = vld [vmem:[#allocation9 + $0x60] sm:$0xf]
    %v938 = vld [vmem:[#allocation9 + $0x64] sm:$0xf]
    %v939 = vld [vmem:[#allocation9 + $0x68] sm:$0xf]
    %v940 = vld [vmem:[#allocation9 + $0x6c] sm:$0xf]
    %v941 = vld [vmem:[#allocation9 + $0x70] sm:$0xf]
    %v942 = vld [vmem:[#allocation9 + $0x74] sm:$0xf]
    %v943 = vld [vmem:[#allocation9 + $0x78] sm:$0xf]
    %v944 = vld [vmem:[#allocation9 + $0x7c] sm:$0xf]
    %v945 = vld [vmem:[%s5] sm:$0x1]
    %v947 = vlaneseq
    %v948 = vshrl.u32 %v947, 7
    %v949 = vsub.s32 0, %v948
    %v950 = vrot.slane %v945, %v949
    %v984 = vunpack.c.l.b16 %v913
    %v985 = vunpack.c.l.b16 %v914
    %v986 = vunpack.c.l.b16 %v915
    %v987 = vunpack.c.l.b16 %v916
    %v988 = vunpack.c.l.b16 %v917
    %v989 = vunpack.c.l.b16 %v918
    %v990 = vunpack.c.l.b16 %v919
    %v991 = vunpack.c.l.b16 %v920
    %v992 = vunpack.c.l.b16 %v921
    %v993 = vunpack.c.l.b16 %v922
    %v994 = vunpack.c.l.b16 %v923
    %v995 = vunpack.c.l.b16 %v924
    %v996 = vunpack.c.l.b16 %v925
    %v997 = vunpack.c.l.b16 %v926
    %v998 = vunpack.c.l.b16 %v927
    %v999 = vunpack.c.l.b16 %v928
    %v1000 = vunpack.c.l.b16 %v929
    %v1001 = vunpack.c.l.b16 %v930
    %v1002 = vunpack.c.l.b16 %v931
    %v1003 = vunpack.c.l.b16 %v932
    %v1004 = vunpack.c.l.b16 %v933
    %v1005 = vunpack.c.l.b16 %v934
    %v1006 = vunpack.c.l.b16 %v935
    %v1007 = vunpack.c.l.b16 %v936
    %v1008 = vunpack.c.l.b16 %v937
    %v1009 = vunpack.c.l.b16 %v938
    %v1010 = vunpack.c.l.b16 %v939
    %v1011 = vunpack.c.l.b16 %v940
    %v1012 = vunpack.c.l.b16 %v941
    %v1013 = vunpack.c.l.b16 %v942
    %v1014 = vunpack.c.l.b16 %v943
    %v1015 = vunpack.c.l.b16 %v944
    %v1016 = vpack.c.b16 %v985, %v984
    %v1017 = vpack.c.b16 %v987, %v986
    %v1018 = vpack.c.b16 %v989, %v988
    %v1019 = vpack.c.b16 %v991, %v990
    %v1020 = vpack.c.b16 %v993, %v992
    %v1021 = vpack.c.b16 %v995, %v994
    %v1022 = vpack.c.b16 %v997, %v996
    %v1023 = vpack.c.b16 %v999, %v998
    %v1024 = vpack.c.b16 %v1001, %v1000
    %v1025 = vpack.c.b16 %v1003, %v1002
    %v1026 = vpack.c.b16 %v1005, %v1004
    %v1027 = vpack.c.b16 %v1007, %v1006
    %v1028 = vpack.c.b16 %v1009, %v1008
    %v1029 = vpack.c.b16 %v1011, %v1010
    %v1030 = vpack.c.b16 %v1013, %v1012
    %v1031 = vpack.c.b16 %v1015, %v1014
    %1048 = vmatprep.subr.bf16.mxu0 0
    %1049 = vmatpush1.bf16.msra.mxu0 %v1023
    %1050 = vmatprep.subr.bf16.mxu0 0
    %1051 = vmatpush1.bf16.msra.mxu0 %v1022
    %1052 = vmatprep.subr.bf16.mxu0 0
    %1053 = vmatpush1.bf16.msra.mxu0 %v1021
    %1054 = vmatprep.subr.bf16.mxu0 0
    %1055 = vmatpush1.bf16.msra.mxu0 %v1020
    %1056 = vmatprep.subr.bf16.mxu0 0
    %1057 = vmatpush1.bf16.msra.mxu0 %v1019
    %1058 = vmatprep.subr.bf16.mxu0 0
    %1059 = vmatpush1.bf16.msra.mxu0 %v1018
    %1060 = vmatprep.subr.bf16.mxu0 0
    %1061 = vmatpush1.bf16.msra.mxu0 %v1017
    %1062 = vmatprep.subr.bf16.mxu0 0
    %1063 = vmatpush1.bf16.msra.mxu0 %v1016
    %1064 = vmatprep.subr.bf16.mxu0 0
    %1065 = vmatpush2.bf16.msra.mxu0 %v1031
    %1066 = vmatprep.subr.bf16.mxu0 0
    %1067 = vmatpush2.bf16.msra.mxu0 %v1030
    %1068 = vmatprep.subr.bf16.mxu0 0
    %1069 = vmatpush2.bf16.msra.mxu0 %v1029
    %1070 = vmatprep.subr.bf16.mxu0 0
    %1071 = vmatpush2.bf16.msra.mxu0 %v1028
    %1072 = vmatprep.subr.bf16.mxu0 0
    %1073 = vmatpush2.bf16.msra.mxu0 %v1027
    %1074 = vmatprep.subr.bf16.mxu0 0
    %1075 = vmatpush2.bf16.msra.mxu0 %v1026
    %1076 = vmatprep.subr.bf16.mxu0 0
    %1077 = vmatpush2.bf16.msra.mxu0 %v1025
    %1078 = vmatprep.subr.bf16.mxu0 0
    %1079 = vmatpush2.bf16.msra.mxu0 %v1024
    %1080 = vmatprep.mubr.bf16.mxu0 %v912
    %1081 = vmatmul.mubr.bf16.gmra.mxu0 %v911
    %v1082 = vpop.f32.mrf.mxu0
    %v1083 = vadd.f32 %v950, %v1082
    %v1084 = vpop.f32.mrf.mxu0
    %v1085 = vpop.f32.mrf.mxu0
    %v1086 = vpop.f32.mrf.mxu0
    %1087 = vdwg.mxu0
    %v1088 = vlaneseq
    %v1089 = vand.u32 %v1088, 127
    %v1090 = vmax.f32 %v1083, -20.0
    %v1091 = vmin.f32 %v1090, 2.0
    %vm1092 = vcmp.lt.s32.totalorder %v1089, 4
    %v1093 = vsel %vm1092, %v1083, %v1091
    %1094 = vst [vmem:[%s6] sm:$0xff] %v1093
    // Predicated region
    $region46: #{policy_forward.1} parent=1 // pred_check
      _
    $region47: #{policy_forward.1} parent=1 // pred_check_branch
      %1096 = sbr.rel (0) target = $region49
    $region48: #{policy_forward.1} parent=1 // pred_region
      _
    $region49: #{policy_forward.1} parent=1 // pred_fallthru
      _
    // Predicated region
    $region50: #{policy_forward.1} parent=1 // pred_check
      _
    $region51: #{policy_forward.1} parent=1 // pred_check_branch
      %1098 = sbr.rel (0) target = $region53
    $region52: #{policy_forward.1} parent=1 // pred_region
      _
    $region53: #{policy_forward.1} parent=1 // pred_fallthru
      _
    %1099 = vsyncpa [#allocation3], 1
    %1100 = vsyncpa [#allocation5], 1
    %1101 = vsyncpa [#allocation8], 1

</llo_original>
